<compile_context>
chip_gen: v7x
topology: tpu7x:2x2x1
jax: 0.10.0
libtpu: 0.0.40
codegen_flags: <defaults>
</compile_context>

<pallas_src>
import functools

import jax
import jax.numpy as jnp
from jax.experimental import pallas as pl
from jax.experimental.pallas import tpu as pltpu


def _round_up(x: int, m: int) -> int:
    return (x + m - 1) // m * m


def _dist_loss_kernel(t_s_ref, logits_ref, target_ref, partial_ref, *, fold):
    """Accumulates the KL sum of one (tb, C) tile into an (8, C) partial buffer."""
    i = pl.program_id(1)

    @pl.when(i == 0)
    def _():
        partial_ref[...] = jnp.zeros_like(partial_ref)

    t_s = t_s_ref[0, 0]                                    # precomputed scalar (SMEM)

    x = logits_ref[...].astype(jnp.float32) * t_s          # (tb, C)
    # log_softmax along the class (lane) axis
    m = jnp.max(x, axis=-1, keepdims=True)
    lse = m + jnp.log(jnp.sum(jnp.exp(x - m), axis=-1, keepdims=True))
    logprob = x - lse                                      # (tb, C)

    tgt = target_ref[...].astype(jnp.float32)
    # KLDiv pointwise term: xlogy(t, t) - t * logprob   (0*log(0) := 0)
    safe_t = jnp.where(tgt > 0, tgt, 1.0)
    elt = jnp.where(tgt > 0, tgt * jnp.log(safe_t), 0.0) - tgt * logprob

    # Fold the tb rows into the lane-resident (8, C) accumulator: static,
    # tile-aligned row slices -> pure VPU vreg adds, no per-step XLU reduction.
    part = elt[0:8, :]
    for r in range(1, fold):
        part = part + elt[r * 8:(r + 1) * 8, :]
    partial_ref[...] += part


def distillation_loss(t_s_param, unscaled_logits, target, *, tb=512, num_partials=2):
    """t_s_param: () learnable temperature parameter.
    unscaled_logits, target: (N, C); target is a probability distribution.
    Returns the scalar batchmean KL loss (float32)."""
    n, c = unscaled_logits.shape
    assert target.shape == (n, c)
    in_dtype = unscaled_logits.dtype
    itemsize = jnp.dtype(in_dtype).itemsize

    # Temperature hoisted out of the kernel: one scalar exp/clamp.
    t_s = jnp.clip(jnp.exp(jnp.asarray(t_s_param, jnp.float32)), 1.0, 100.0)
    t_smem = jnp.reshape(t_s, (1, 1))

    # ---- class axis: pad to a full lane multiple (128) -----------------------
    c_pad = _round_up(c, 128)
    if c_pad != c:
        # Padded logit columns get a large negative value -> exp underflows to 0
        # in the row LSE; padded target columns are 0 -> zero contribution.
        pad_val = -float(min(1e9, 0.25 * float(jnp.finfo(in_dtype).max)))
        unscaled_logits = jnp.pad(unscaled_logits, ((0, 0), (0, c_pad - c)),
                                  constant_values=pad_val)
        target = jnp.pad(target, ((0, 0), (0, c_pad - c)))

    # ---- batch tiling ---------------------------------------------------------
    row_mult = 16 if itemsize < 4 else 8        # sublane packing for sub-32-bit dtypes
    tb = max(row_mult, min(_round_up(int(tb), row_mult), _round_up(n, row_mult)))
    # Keep (2 inputs x 2 pipeline buffers) of (tb, c_pad) tiles well under the
    # smallest per-generation VMEM budget.
    while tb > row_mult and 2 * 2 * tb * c_pad * itemsize > (12 << 20):
        tb = max(row_mult, _round_up(tb // 2, row_mult))

    n_blocks = pl.cdiv(n, tb)
    num_partials = max(1, min(int(num_partials), int(n_blocks)))
    blocks_per_partial = pl.cdiv(n_blocks, num_partials)
    n_padded = int(num_partials * blocks_per_partial * tb)
    if n_padded != n:
        # Zero-padded rows have target == 0 everywhere -> contribute exactly 0.
        unscaled_logits = jnp.pad(unscaled_logits, ((0, n_padded - n), (0, 0)))
        target = jnp.pad(target, ((0, n_padded - n), (0, 0)))

    kernel = functools.partial(_dist_loss_kernel, fold=tb // 8)

    def in_idx(cpart, i):
        return (cpart * blocks_per_partial + i, 0)

    vmem_need = 2 * 2 * tb * c_pad * itemsize + 2 * 8 * c_pad * 4 + (1 << 20)
    vmem_limit = int(min(48 << 20, max(32 << 20, 2 * vmem_need)))

    cost = pl.CostEstimate(
        flops=8 * n_padded * c_pad,
        transcendentals=2 * n_padded * c_pad,
        bytes_accessed=2 * n_padded * c_pad * itemsize + num_partials * 8 * c_pad * 4,
    )

    partials = pl.pallas_call(
        kernel,
        out_shape=jax.ShapeDtypeStruct((num_partials * 8, c_pad), jnp.float32),
        grid_spec=pltpu.PrefetchScalarGridSpec(
            num_scalar_prefetch=0,
            grid=(num_partials, int(blocks_per_partial)),
            in_specs=[
                pl.BlockSpec(memory_space=pltpu.SMEM),        # T_s scalar (1, 1)
                pl.BlockSpec((tb, c_pad), in_idx),            # logits tile
                pl.BlockSpec((tb, c_pad), in_idx),            # target tile
            ],
            out_specs=pl.BlockSpec((8, c_pad), lambda cpart, i: (cpart, 0)),
        ),
        compiler_params=pltpu.CompilerParams(
            dimension_semantics=("parallel", "arbitrary"),
            vmem_limit_bytes=vmem_limit,
        ),
        cost_estimate=cost,
    )(t_smem, unscaled_logits, target)

    # Final tiny cross-lane reduction + 'batchmean' division outside the kernel.
    return jnp.sum(partials) / jnp.float32(n)


def _reference(t_s_param, logits, target):
    t_s = jnp.clip(jnp.exp(jnp.asarray(t_s_param, jnp.float32)), 1.0, 100.0)
    logprob = jax.nn.log_softmax(logits.astype(jnp.float32) * t_s, axis=1)
    tgt = target.astype(jnp.float32)
    elt = jnp.where(tgt > 0, tgt * jnp.log(jnp.where(tgt > 0, tgt, 1.0)), 0.0) \
          - tgt * logprob
    return jnp.sum(elt) / logits.shape[0]


if __name__ == "__main__":
    key = jax.random.PRNGKey(0)
    k1, k2, k3, k4 = jax.random.split(key, 4)

    # Deterministic parameter init, matching nn.Parameter(torch.tensor(3.9)).
    t_s_param = jnp.float32(3.9)

    # Case 1: aligned shapes.
    N, C = 16, 128
    logits = jax.random.normal(k1, (N, C), dtype=jnp.float32)
    target = jax.nn.softmax(jax.random.normal(k2, (N, C), dtype=jnp.float32), axis=1)
    loss = jax.block_until_ready(distillation_loss(t_s_param, logits, target))
    ref = _reference(t_s_param, logits, target)
    assert jnp.allclose(loss, ref, rtol=1e-4, atol=1e-5), (loss, ref)

    # Case 2: ragged batch / non-128-multiple class dim (exercises the padding path).
    N2, C2 = 10, 100
    logits2 = jax.random.normal(k3, (N2, C2), dtype=jnp.float32)
    target2 = jax.nn.softmax(jax.random.normal(k4, (N2, C2), dtype=jnp.float32), axis=1)
    loss2 = jax.block_until_ready(distillation_loss(t_s_param, logits2, target2))
    ref2 = _reference(t_s_param, logits2, target2)
    assert jnp.allclose(loss2, ref2, rtol=1e-4, atol=1e-5), (loss2, ref2)

    print("KERNEL_OK")
</pallas_src>

<mosaic_0001>
module attributes {stable_mosaic.version = 11 : i64} {
  func.func @_dist_loss_kernel(%arg0: i32, %arg1: i32, %arg2: memref<1x1xf32, #tpu.memory_space<smem>>, %arg3: memref<16x128xf32, #tpu.memory_space<vmem>>, %arg4: memref<16x128xf32, #tpu.memory_space<vmem>>, %arg5: memref<8x128xf32, #tpu.memory_space<vmem>>) attributes {dimension_semantics = [#tpu.dimension_semantics<parallel>, #tpu.dimension_semantics<arbitrary>], iteration_bounds = array<i64: 1, 1>, scalar_prefetch = 0 : i64, scratch_operands = 0 : i64, tpu.core_type = #tpu.core_type<tc>, window_params = [{transform_indices = @transform_0, window_bounds = array<i64: 1, 1>}, {transform_indices = @transform_1, window_bounds = array<i64: 16, 128>}, {transform_indices = @transform_2, window_bounds = array<i64: 16, 128>}, {transform_indices = @transform_3, window_bounds = array<i64: 8, 128>}]} {
    %c0_i32 = arith.constant 0 : i32
    %0 = arith.cmpi eq, %arg1, %c0_i32 : i32
    %1 = arith.extui %0 : i1 to i32
    %c0_i32_0 = arith.constant 0 : i32
    %2 = arith.cmpi ne, %1, %c0_i32_0 : i32
    scf.if %2 {
      %cst_15 = arith.constant 0.000000e+00 : f32
      %37 = vector.broadcast %cst_15 : f32 to vector<8x128xf32>
      %c0_16 = arith.constant 0 : index
      %c0_17 = arith.constant 0 : index
      %38 = vector.load %arg5[%c0_16, %c0_17] : memref<8x128xf32, #tpu.memory_space<vmem>>, vector<8x128xf32>
      tpu.vector_store %arg5[%c0_16, %c0_17], %37 {strides = array<i32>} : memref<8x128xf32, #tpu.memory_space<vmem>>, vector<8x128xf32>,
    } else {
    }
    %c0 = arith.constant 0 : index
    %c0_1 = arith.constant 0 : index
    %3 = memref.load %arg2[%c0, %c0_1] : memref<1x1xf32, #tpu.memory_space<smem>>
    %c0_2 = arith.constant 0 : index
    %c0_3 = arith.constant 0 : index
    %4 = vector.load %arg3[%c0_2, %c0_3] : memref<16x128xf32, #tpu.memory_space<vmem>>, vector<16x128xf32>
    %5 = vector.broadcast %3 : f32 to vector<16x128xf32>
    %6 = arith.mulf %4, %5 : vector<16x128xf32>
    %cst = arith.constant dense<0xFF800000> : vector<16xf32>
    %7 = vector.multi_reduction <maximumf>, %6, %cst [1] : vector<16x128xf32> to vector<16xf32>
    %8 = vector.shape_cast %7 : vector<16xf32> to vector<16x1xf32>
    %9 = vector.broadcast %8 : vector<16x1xf32> to vector<16x128xf32>
    %10 = arith.subf %6, %9 : vector<16x128xf32>
    %11 = math.exp %10 : vector<16x128xf32>
    %cst_4 = arith.constant dense<0.000000e+00> : vector<16xf32>
    %12 = vector.multi_reduction <add>, %11, %cst_4 [1] : vector<16x128xf32> to vector<16xf32>
    %13 = vector.shape_cast %12 : vector<16xf32> to vector<16x1xf32>
    %14 = math.log %13 : vector<16x1xf32>
    %15 = arith.addf %8, %14 : vector<16x1xf32>
    %16 = vector.broadcast %15 : vector<16x1xf32> to vector<16x128xf32>
    %17 = arith.subf %6, %16 : vector<16x128xf32>
    %c0_5 = arith.constant 0 : index
    %c0_6 = arith.constant 0 : index
    %18 = vector.load %arg4[%c0_5, %c0_6] : memref<16x128xf32, #tpu.memory_space<vmem>>, vector<16x128xf32>
    %cst_7 = arith.constant 0.000000e+00 : f32
    %19 = vector.broadcast %cst_7 : f32 to vector<16x128xf32>
    %20 = arith.cmpf ogt, %18, %19 : vector<16x128xf32>
    %cst_8 = arith.constant 1.000000e+00 : f32
    %21 = vector.broadcast %cst_8 : f32 to vector<16x128xf32>
    %22 = arith.select %20, %18, %21 : vector<16x128xi1>, vector<16x128xf32>
    %cst_9 = arith.constant 0.000000e+00 : f32
    %23 = vector.broadcast %cst_9 : f32 to vector<16x128xf32>
    %24 = arith.cmpf ogt, %18, %23 : vector<16x128xf32>
    %25 = math.log %22 : vector<16x128xf32>
    %26 = arith.mulf %18, %25 : vector<16x128xf32>
    %cst_10 = arith.constant 0.000000e+00 : f32
    %27 = vector.broadcast %cst_10 : f32 to vector<16x128xf32>
    %28 = arith.select %24, %26, %27 : vector<16x128xi1>, vector<16x128xf32>
    %29 = arith.mulf %18, %17 : vector<16x128xf32>
    %30 = arith.subf %28, %29 : vector<16x128xf32>
    %31 = vector.extract_strided_slice %30 {offsets = [0, 0], sizes = [8, 128], strides = [1, 1]} : vector<16x128xf32> to vector<8x128xf32>
    %32 = vector.extract_strided_slice %30 {offsets = [8, 0], sizes = [8, 128], strides = [1, 1]} : vector<16x128xf32> to vector<8x128xf32>
    %33 = arith.addf %31, %32 : vector<8x128xf32>
    %c0_11 = arith.constant 0 : index
    %c0_12 = arith.constant 0 : index
    %34 = vector.load %arg5[%c0_11, %c0_12] : memref<8x128xf32, #tpu.memory_space<vmem>>, vector<8x128xf32>
    %35 = arith.addf %34, %33 : vector<8x128xf32>
    %c0_13 = arith.constant 0 : index
    %c0_14 = arith.constant 0 : index
    %36 = vector.load %arg5[%c0_13, %c0_14] : memref<8x128xf32, #tpu.memory_space<vmem>>, vector<8x128xf32>
    tpu.vector_store %arg5[%c0_13, %c0_14], %35 {strides = array<i32>} : memref<8x128xf32, #tpu.memory_space<vmem>>, vector<8x128xf32>,
    return
  }
  func.func @transform_0(%arg0: i32, %arg1: i32) -> (i32, i32) {
    %c0_i32 = arith.constant 0 : i32
    %c0_i32_0 = arith.constant 0 : i32
    %c0_i32_1 = arith.constant 0 : i32
    return %c0_i32, %c0_i32_0 : i32, i32
  }
  func.func @transform_1(%arg0: i32, %arg1: i32) -> (i32, i32) {
    %c1_i32 = arith.constant 1 : i32
    %0 = arith.muli %arg0, %c1_i32 : i32
    %1 = arith.addi %0, %arg1 : i32
    %c0_i32 = arith.constant 0 : i32
    %c0_i32_0 = arith.constant 0 : i32
    return %1, %c0_i32 : i32, i32
  }
  func.func @transform_2(%arg0: i32, %arg1: i32) -> (i32, i32) {
    %c1_i32 = arith.constant 1 : i32
    %0 = arith.muli %arg0, %c1_i32 : i32
    %1 = arith.addi %0, %arg1 : i32
    %c0_i32 = arith.constant 0 : i32
    %c0_i32_0 = arith.constant 0 : i32
    return %1, %c0_i32 : i32, i32
  }
  func.func @transform_3(%arg0: i32, %arg1: i32) -> (i32, i32) {
    %c0_i32 = arith.constant 0 : i32
    %c0_i32_0 = arith.constant 0 : i32
    return %arg0, %c0_i32 : i32, i32
  }
}

</mosaic_0001>

<llo_original>
// kernel: tpu_custom_call.1
$region0: #{tpu_custom_call.1}
  #allocation0 [shape = 'u32[]', space=smem, size = 0x4, offset = 0x4, fixed_abs, tag = 'smem constant byte address 0x4 - core index']
  #allocation1 [shape = 'u32[144,128]{1,0:T(1,128)}', space=vmem, size = 0x12000, scoped, tag = 'internal scratch']
  #allocation2 [shape = 'f32[1,1]{1,0:T(1,128)S(6)}', space=smem, size = 0x200, scoped, tag = 'scoped memory for tpu_custom_call.1']
  %s0 = inlined_call_operand.<no memory space> [shape: f32[1,1], index: 0, kind: input, shape index: {}]
  %s1 = inlined_call_operand.hbm [shape: f32[16,128], index: 1, kind: input, shape index: {}]
  %s2 = inlined_call_operand.hbm [shape: f32[16,128], index: 2, kind: input, shape index: {}]
  %s3 = inlined_call_operand.hbm [shape: f32[8,128], index: 3, kind: output, shape index: {}]
  %s4 = sld [smem:[#allocation0]]
  $region34: #{tpu_custom_call.1} parent=0
    _
  %s6 = ssub.s32 1, %s4
  %s7 = scalar_select 0, %s6, %s4
  %8 = sst [smem:[#allocation2]] %s0
  $region1: #{tpu_custom_call.1} parent=0
    #allocation3 [shape = 'u8[8192]{0}', space=vmem, size = 0x2000, scoped, tag = 'input window, operand 1, single buffered']
    #allocation4 [shape = 's32[1]{0}', space=sflag, size = 0x4, scoped, tag = 'scoped memory for tpu_custom_call.1']
    #allocation5 [shape = 's32[1]{0}', space=sflag, size = 0x4, scoped, tag = 'scoped memory for tpu_custom_call.1']
    #allocation6 [shape = 'u8[8192]{0}', space=vmem, size = 0x2000, scoped, tag = 'input window, operand 2, single buffered']
    #allocation7 [shape = 's32[1]{0}', space=sflag, size = 0x4, scoped, tag = 'scoped memory for tpu_custom_call.1']
    #allocation8 [shape = 'u8[4096]{0}', space=vmem, size = 0x1000, scoped, tag = 'output window, operand 0, single buffered']
    %9 = vsyncpa [#allocation4], 0
    %10 = vsyncpa [#allocation7], 0
    %11 = vsyncpa [#allocation5], 0
    // Predicated region
    $region2: #{tpu_custom_call.1} parent=1 // pred_check
      _
    $region3: #{tpu_custom_call.1} parent=1 // pred_check_branch
      %13 = sbr.rel (0) target = $region5
    $region4: #{tpu_custom_call.1} parent=1 // pred_region
      _
    $region5: #{tpu_custom_call.1} parent=1 // pred_fallthru
      _
    // Predicated region
    $region6: #{tpu_custom_call.1} parent=1 // pred_check
      _
    $region7: #{tpu_custom_call.1} parent=1 // pred_check_branch
      %15 = sbr.rel (0) target = $region9
    $region8: #{tpu_custom_call.1} parent=1 // pred_region
      %s16 = sadd.s32 0, 0
      %s17 = smul.u32 2, %s16
      %s19 = ssub.s32 256, 256
      %20 = vsyncadd [#allocation4], %s19
      %s21 = smul.addr %s17, 128
      %s22 = scalar_lea.hbm %s1, %s21
      %s23 = sshll.u32 [#allocation3], 4
      %s24 = int_to_ptr.vmem [resolvable:$true] %s23
      %29 = dma.hbm_to_vmem [thread:$0]  %s22, 256, %s24, [#allocation4], 128, 128, 8
    $region9: #{tpu_custom_call.1} parent=1 // pred_fallthru
      _
    // Predicated region
    $region10: #{tpu_custom_call.1} parent=1 // pred_check
      _
    $region11: #{tpu_custom_call.1} parent=1 // pred_check_branch
      %31 = sbr.rel (0) target = $region13
    $region12: #{tpu_custom_call.1} parent=1 // pred_region
      %s32 = sadd.s32 0, 0
      %s33 = smul.u32 2, %s32
      %s35 = ssub.s32 256, 256
      %36 = vsyncadd [#allocation7], %s35
      %s37 = smul.addr %s33, 128
      %s38 = scalar_lea.hbm %s2, %s37
      %s39 = sshll.u32 [#allocation6], 4
      %s40 = int_to_ptr.vmem [resolvable:$true] %s39
      %45 = dma.hbm_to_vmem [thread:$0]  %s38, 256, %s40, [#allocation7], 128, 128, 8
    $region13: #{tpu_custom_call.1} parent=1 // pred_fallthru
      _
    // Predicated region
    $region14: #{tpu_custom_call.1} parent=1 // pred_check
      _
    $region15: #{tpu_custom_call.1} parent=1 // pred_check_branch
      %47 = sbr.rel (0) target = $region17
    $region16: #{tpu_custom_call.1} parent=1 // pred_region
      %48 = dma.done [#allocation4], 256
    $region17: #{tpu_custom_call.1} parent=1 // pred_fallthru
      _
    // Predicated region
    $region18: #{tpu_custom_call.1} parent=1 // pred_check
      _
    $region19: #{tpu_custom_call.1} parent=1 // pred_check_branch
      %50 = sbr.rel (0) target = $region21
    $region20: #{tpu_custom_call.1} parent=1 // pred_region
      %51 = dma.done [#allocation7], 256
    $region21: #{tpu_custom_call.1} parent=1 // pred_fallthru
      _
    %s52 = sadd.s32 0, 0
    %s53 = smul.u32 2, %s52
    %s54 = sadd.s32 0, 0
    %s55 = smul.u32 2, %s54
    %p56 = scmp.eq.s32.totalorder 0, 0
    // Predicated region
    $region22: #{tpu_custom_call.1} parent=1 // pred_check
      %p57 = pneg %p56
    $region23: #{tpu_custom_call.1} parent=1 // pred_check_branch
      %59 = sbr.rel (%p57) target = $region25
    $region24: #{tpu_custom_call.1} parent=1 // pred_region
      %60 = vst [vmem:[#allocation8] sm:$0xff] 0.0
    $region25: #{tpu_custom_call.1} parent=1 // pred_fallthru
      _
    %s61 = sld [smem:[#allocation2]]
    %v62 = vld [vmem:[#allocation3] sm:$0xff]
    %v63 = vld [vmem:[#allocation3 + $0x8] sm:$0xff]
    %v64 = vstv %s61
    %v65 = vmul.f32 %v62, %v64
    %v66 = vmul.f32 %v63, %v64
    %67 = vmax.xlane.f32.xlu0 %v65
    %v68 = vpop.xlane.xlu0 %67
    %69 = vmax.xlane.f32.xlu0 %v66
    %v70 = vpop.xlane.xlu0 %69
    %v71 = vsub.f32 %v65, %v68
    %v72 = vsub.f32 %v66, %v70
    %v73 = vmul.f32 %v71, 1.442695
    %v74 = vpow.pop %v73
    %v75 = vmul.f32 %v72, 1.442695
    %v76 = vpow.pop %v75
    %77 = vadd.xlane.f32.xlu0 %v74
    %v78 = vpop.xlane.xlu0 %77
    %79 = vadd.xlane.f32.xlu0 %v76
    %v80 = vpop.xlane.xlu0 %79
    %v81 = vlog2.pop %v78
    %v82 = vmul.f32 %v81, 0.6931472
    %v83 = vlog2.pop %v80
    %v84 = vmul.f32 %v83, 0.6931472
    %v85 = vadd.f32 %v68, %v82
    %v86 = vadd.f32 %v70, %v84
    %v87 = vsub.f32 %v65, %v85
    %v88 = vsub.f32 %v66, %v86
    %v89 = vld [vmem:[#allocation6] sm:$0xff]
    %v90 = vld [vmem:[#allocation6 + $0x8] sm:$0xff]
    %vm91 = vcmp.gt.f32.partialorder %v89, 0.0
    %vm92 = vcmp.gt.f32.partialorder %v90, 0.0
    %v93 = vsel %vm91, %v89, 1.0
    %v94 = vsel %vm92, %v90, 1.0
    %v95 = vlog2.pop %v93
    %v96 = vmul.f32 %v95, 0.6931472
    %v97 = vlog2.pop %v94
    %v98 = vmul.f32 %v97, 0.6931472
    %v99 = vmul.f32 %v89, %v96
    %v100 = vmul.f32 %v90, %v98
    %v101 = vsel %vm91, %v99, 0.0
    %v102 = vsel %vm92, %v100, 0.0
    %v103 = vmul.f32 %v89, %v87
    %v104 = vmul.f32 %v90, %v88
    %v105 = vsub.f32 %v101, %v103
    %v106 = vsub.f32 %v102, %v104
    %v107 = vadd.f32 %v105, %v106
    %v108 = vld [vmem:[#allocation8] sm:$0xff]
    %v109 = vadd.f32 %v108, %v107
    %110 = vst [vmem:[#allocation8] sm:$0xff] %v109
    // Predicated region
    $region26: #{tpu_custom_call.1} parent=1 // pred_check
      _
    $region27: #{tpu_custom_call.1} parent=1 // pred_check_branch
      %112 = sbr.rel (0) target = $region29
    $region28: #{tpu_custom_call.1} parent=1 // pred_region
      %s114 = ssub.s32 128, 128
      %115 = vsyncadd [#allocation5], %s114
      %s117 = sshll.u32 [#allocation8], 4
      %s118 = int_to_ptr.vmem [resolvable:$true] %s117
      %120 = dma.vmem_to_hbm [thread:$0]  %s118, 128, %s3, [#allocation5]
    $region29: #{tpu_custom_call.1} parent=1 // pred_fallthru
      _
    // Predicated region
    $region30: #{tpu_custom_call.1} parent=1 // pred_check
      _
    $region31: #{tpu_custom_call.1} parent=1 // pred_check_branch
      %122 = sbr.rel (0) target = $region33
    $region32: #{tpu_custom_call.1} parent=1 // pred_region
      %123 = dma.done [#allocation5], 128
    $region33: #{tpu_custom_call.1} parent=1 // pred_fallthru
      _
    %124 = vsyncpa [#allocation4], 1
    %125 = vsyncpa [#allocation7], 1
    %126 = vsyncpa [#allocation5], 1

</llo_original>
